<compile_context>
chip_gen: v7x
topology: tpu7x:2x2x1
jax: 0.10.0
libtpu: 0.0.40
codegen_flags: <defaults>
</compile_context>

<pallas_src>
import jax
import jax.numpy as jnp
from jax import lax
from jax.experimental import pallas as pl
from jax.experimental.pallas import tpu as pltpu

_EPS = 1e-07
_VMEM_LIMIT_BYTES = 40 * 1024 * 1024   # explicit scoped-VMEM limit (<= 48 MiB per v7x guidance)
_N_F32_TEMPS = 5                       # live block-sized f32 temporaries in the kernel body


def _round_up(x: int, m: int) -> int:
    return ((x + m - 1) // m) * m


def _vmem_budget_bytes() -> int:
    """Target VMEM footprint of one grid step (double-buffered inputs + temps)."""
    cap = 64 * 1024 * 1024                          # assume the smallest (v7x physical)
    try:
        cap = int(pltpu.get_tpu_info().vmem_capacity_bytes)
    except Exception:
        pass
    return max(4 * 1024 * 1024, min(20 * 1024 * 1024, cap // 3))


def _detect_num_tensorcores() -> int:
    """Best-effort TensorCores-per-device query (2 on v7x, 1 on v5e/v6e)."""
    try:
        info = pltpu.get_tpu_info()
    except Exception:
        return 1
    for attr in ("num_tensorcores", "tensorcores_per_chip",
                 "num_cores_per_chip", "num_cores"):
        v = getattr(info, attr, None)
        if isinstance(v, int) and 1 <= v <= 4:
            return v
    return 1   # safe default; correctness does not depend on this value


# ---------------------------------------------------------------------------
# Kernel A: small C -- logits tile (C, TN), classes on sublanes, batch on lanes
# ---------------------------------------------------------------------------
def _f1_partials_kernel_cn(x_ref, lab_ref, tp_ref, ps_ref, cnt_ref,
                           acc_tp, acc_ps, acc_cnt):
    i = pl.program_id(1)

    @pl.when(i == 0)
    def _init():
        acc_tp[...] = jnp.zeros_like(acc_tp)
        acc_ps[...] = jnp.zeros_like(acc_ps)
        acc_cnt[...] = jnp.zeros_like(acc_cnt)

    lab = lab_ref[...]                               # (1, TN) int32, -1 == padding
    valid = lab >= 0                                 # (1, TN) bool
    # Sanitize BEFORE max/exp: ragged edge blocks hold uninitialized logits.
    x = jnp.where(valid, x_ref[...].astype(jnp.float32), 0.0)   # (C, TN)

    # Numerically stable softmax over the class (sublane) axis.
    m = jnp.max(x, axis=0, keepdims=True)            # (1, TN)
    e = jnp.exp(x - m)                               # (C, TN)
    s = jnp.sum(e, axis=0, keepdims=True)            # (1, TN), >= 1
    inv = pl.reciprocal(s, approx=True)              # EUP seed (free slot)
    inv = inv * (2.0 - s * inv)                      # one Newton step -> ~f32 accuracy
    inv = jnp.where(valid, inv, 0.0)                 # fold padding mask into inv
    p = e * inv                                      # (C, TN); 0 in padded columns

    cls = lax.broadcasted_iota(jnp.int32, x.shape, 0)
    onehot = lab == cls                              # (C, TN) bool; False on pads

    acc_tp[...] += jnp.sum(jnp.where(onehot, p, 0.0), axis=1, keepdims=True)
    acc_ps[...] += jnp.sum(p, axis=1, keepdims=True)
    acc_cnt[...] += jnp.sum(onehot.astype(jnp.float32), axis=1, keepdims=True)

    @pl.when(i == pl.num_programs(1) - 1)
    def _finalize():
        tp_ref[...] = jnp.broadcast_to(acc_tp[...], tp_ref.shape)
        ps_ref[...] = jnp.broadcast_to(acc_ps[...], ps_ref.shape)
        cnt_ref[...] = jnp.broadcast_to(acc_cnt[...], cnt_ref.shape)


# ---------------------------------------------------------------------------
# Kernel B: C >= 128 -- logits tile (TN, C), batch on sublanes, classes on lanes
# (no host-side transpose needed)
# ---------------------------------------------------------------------------
def _f1_partials_kernel_nc(x_ref, lab_ref, tp_ref, ps_ref, cnt_ref,
                           acc_tp, acc_ps, acc_cnt):
    i = pl.program_id(1)

    @pl.when(i == 0)
    def _init():
        acc_tp[...] = jnp.zeros_like(acc_tp)
        acc_ps[...] = jnp.zeros_like(acc_ps)
        acc_cnt[...] = jnp.zeros_like(acc_cnt)

    lab = lab_ref[...]                               # (TN, 1) int32, -1 == padding
    valid = lab >= 0                                 # (TN, 1) bool
    x = jnp.where(valid, x_ref[...].astype(jnp.float32), 0.0)   # (TN, C)

    m = jnp.max(x, axis=1, keepdims=True)            # (TN, 1)
    e = jnp.exp(x - m)
    s = jnp.sum(e, axis=1, keepdims=True)            # (TN, 1)
    inv = pl.reciprocal(s, approx=True)
    inv = inv * (2.0 - s * inv)
    inv = jnp.where(valid, inv, 0.0)
    p = e * inv                                      # (TN, C)

    cls = lax.broadcasted_iota(jnp.int32, x.shape, 1)
    onehot = lab == cls                              # (TN, C)

    acc_tp[...] += jnp.sum(jnp.where(onehot, p, 0.0), axis=0, keepdims=True)
    acc_ps[...] += jnp.sum(p, axis=0, keepdims=True)
    acc_cnt[...] += jnp.sum(onehot.astype(jnp.float32), axis=0, keepdims=True)

    @pl.when(i == pl.num_programs(1) - 1)
    def _finalize():
        tp_ref[...] = jnp.broadcast_to(acc_tp[...], tp_ref.shape)
        ps_ref[...] = jnp.broadcast_to(acc_ps[...], ps_ref.shape)
        cnt_ref[...] = jnp.broadcast_to(acc_cnt[...], cnt_ref.shape)


def f1_loss(y_pred: jax.Array, y_true: jax.Array, *,
            epsilon: float = _EPS, n_cores: int | None = None,
            max_tile: int | None = None) -> jax.Array:
    """Pallas TPU implementation of F1_Loss.forward.

    y_pred: (N, C) float logits (f32 or bf16, DMA'd in native dtype)
    y_true: (N,) int class labels
    returns: scalar float32 loss = 1 - mean(per-class F1)
    """
    assert y_pred.ndim == 2
    assert y_true.ndim == 1
    N, C = y_pred.shape
    itemsize = y_pred.dtype.itemsize

    if n_cores is None:
        n_cores = _detect_num_tensorcores()
    n_cores = max(1, int(n_cores))
    budget = _vmem_budget_bytes()
    labels = y_true.astype(jnp.int32)
    compiler_params = pltpu.CompilerParams(
        dimension_semantics=("parallel", "arbitrary"),
        vmem_limit_bytes=_VMEM_LIMIT_BYTES)

    if C >= 128:
        # ---- classes on lanes: consume (N, C) directly, no transpose -------
        c_lanes = _round_up(C, 128)
        per_row = (2 * c_lanes * itemsize            # double-buffered logits tile
                   + 2 * 128 * 4                     # double-buffered (TN,1) labels (lane-padded)
                   + _N_F32_TEMPS * c_lanes * 4      # (TN, C) f32 temporaries
                   + 4 * 128 * 4)                    # (TN, 1) temporaries
        tn = max(8, (budget // per_row) // 8 * 8)
        tn = min(tn, _round_up(pl.cdiv(N, n_cores), 8))
        if max_tile is not None:
            tn = min(tn, max(8, (max_tile // 8) * 8))
        tpc = pl.cdiv(N, n_cores * tn)
        n_padded = n_cores * tpc * tn
        labels = jnp.pad(labels, (0, n_padded - N), constant_values=-1)
        labels = labels.reshape(n_padded, 1)
        n_valid_blocks = pl.cdiv(N, tn)              # logits blocks that overlap real data

        def x_map(c, i):                             # clamp fully-OOB blocks (masked anyway)
            return (jnp.minimum(c * tpc + i, n_valid_blocks - 1), 0)

        def lab_map(c, i):
            return (c * tpc + i, 0)

        part_shape = jax.ShapeDtypeStruct((n_cores * 8, C), jnp.float32)
        tp_p, ps_p, cnt_p = pl.pallas_call(
            _f1_partials_kernel_nc,
            out_shape=(part_shape, part_shape, part_shape),
            grid_spec=pltpu.PrefetchScalarGridSpec(
                num_scalar_prefetch=0,
                grid=(n_cores, tpc),
                in_specs=[
                    pl.BlockSpec((tn, C), x_map),
                    pl.BlockSpec((tn, 1), lab_map),
                ],
                out_specs=[pl.BlockSpec((8, C), lambda c, i: (c, 0))
                           for _ in range(3)],
                scratch_shapes=[pltpu.VMEM((1, C), jnp.float32)
                                for _ in range(3)],
            ),
            compiler_params=compiler_params,
        )(y_pred, labels)
        tp = tp_p.reshape(n_cores, 8, C)[:, 0, :].sum(axis=0)
        colsum_p = ps_p.reshape(n_cores, 8, C)[:, 0, :].sum(axis=0)
        count = cnt_p.reshape(n_cores, 8, C)[:, 0, :].sum(axis=0)
    else:
        # ---- batch on lanes: transposed (C, N) layout for small C ----------
        c_sub = _round_up(C, 8)
        per_lane = (2 * c_sub * itemsize             # double-buffered logits tile
                    + 2 * 8 * 4                      # double-buffered (1,TN) labels (sublane-padded)
                    + _N_F32_TEMPS * c_sub * 4       # (C, TN) f32 temporaries
                    + 4 * 8 * 4)                     # (1, TN) temporaries
        lt = max(128, (budget // per_lane) // 128 * 128)
        lt = min(lt, _round_up(pl.cdiv(N, n_cores), 128))
        if max_tile is not None:
            lt = min(lt, max(128, (max_tile // 128) * 128))
        tpc = pl.cdiv(N, n_cores * lt)
        n_padded = n_cores * tpc * lt
        x_t = jnp.transpose(y_pred)                  # (C, N); NOT padded
        labels = jnp.pad(labels, (0, n_padded - N), constant_values=-1)
        labels = labels.reshape(1, n_padded)
        n_valid_blocks = pl.cdiv(N, lt)

        def x_map(c, i):
            return (0, jnp.minimum(c * tpc + i, n_valid_blocks - 1))

        def lab_map(c, i):
            return (0, c * tpc + i)

        part_shape = jax.ShapeDtypeStruct((C, n_cores * 128), jnp.float32)
        tp_p, ps_p, cnt_p = pl.pallas_call(
            _f1_partials_kernel_cn,
            out_shape=(part_shape, part_shape, part_shape),
            grid_spec=pltpu.PrefetchScalarGridSpec(
                num_scalar_prefetch=0,
                grid=(n_cores, tpc),
                in_specs=[
                    pl.BlockSpec((C, lt), x_map),
                    pl.BlockSpec((1, lt), lab_map),
                ],
                out_specs=[pl.BlockSpec((C, 128), lambda c, i: (0, c))
                           for _ in range(3)],
                scratch_shapes=[pltpu.VMEM((C, 1), jnp.float32)
                                for _ in range(3)],
            ),
            compiler_params=compiler_params,
        )(x_t, labels)
        tp = tp_p.reshape(C, n_cores, 128)[:, :, 0].sum(axis=1)
        colsum_p = ps_p.reshape(C, n_cores, 128)[:, :, 0].sum(axis=1)
        count = cnt_p.reshape(C, n_cores, 128)[:, :, 0].sum(axis=1)

    # ---- tiny (C,)-sized epilogue in plain XLA ------------------------------
    fp = colsum_p - tp                               # sum((1-onehot)*p) = sum(p) - tp
    fn = count - tp                                  # sum(onehot*(1-p)) = count - tp
    precision = tp / (tp + fp + epsilon)
    recall = tp / (tp + fn + epsilon)
    f1 = 2.0 * precision * recall / (precision + recall + epsilon)
    f1 = jnp.clip(f1, epsilon, 1.0 - epsilon)
    return (1.0 - jnp.mean(f1)).astype(jnp.float32)


def _f1_loss_ref(y_pred, y_true):
    """Pure-JAX reference mirroring the PyTorch module."""
    num_class = y_pred.shape[1]
    y_onehot = jax.nn.one_hot(y_true, num_class, dtype=jnp.float32)
    p = jax.nn.softmax(y_pred.astype(jnp.float32), axis=1)
    tp = jnp.sum(y_onehot * p, axis=0)
    fp = jnp.sum((1.0 - y_onehot) * p, axis=0)
    fn = jnp.sum(y_onehot * (1.0 - p), axis=0)
    precision = tp / (tp + fp + _EPS)
    recall = tp / (tp + fn + _EPS)
    f1 = 2.0 * (precision * recall) / (precision + recall + _EPS)
    f1 = jnp.clip(f1, _EPS, 1.0 - _EPS)
    return 1.0 - jnp.mean(f1)


if __name__ == "__main__":
    key = jax.random.PRNGKey(0)
    k1, k2, k3, k4, k5, k6 = jax.random.split(key, 6)

    # Primary small-shape example: batch of 16 examples, 8 classes.
    N, C = 16, 8
    y_pred = jax.random.normal(k1, (N, C), dtype=jnp.float32)
    y_true = jax.random.randint(k2, (N,), 0, C, dtype=jnp.int32)
    loss = jax.jit(f1_loss)(y_pred, y_true)
    jax.block_until_ready(loss)
    ref = _f1_loss_ref(y_pred, y_true)
    assert jnp.allclose(loss, ref, atol=1e-4, rtol=1e-4), (loss, ref)

    # Ragged batch + multi-tile streamed accumulation on the small-C path.
    N2, C2 = 200, 8
    yp2 = 4.0 * jax.random.normal(k3, (N2, C2), dtype=jnp.float32)
    yt2 = jax.random.randint(k4, (N2,), 0, C2, dtype=jnp.int32)
    loss2 = jax.jit(lambda a, b: f1_loss(a, b, max_tile=128))(yp2, yt2)
    jax.block_until_ready(loss2)
    ref2 = _f1_loss_ref(yp2, yt2)
    assert jnp.allclose(loss2, ref2, atol=1e-4, rtol=1e-4), (loss2, ref2)

    # Transpose-free classes-on-lanes path (C >= 128), ragged rows.
    N3, C3 = 72, 128
    yp3 = jax.random.normal(k5, (N3, C3), dtype=jnp.float32)
    yt3 = jax.random.randint(k6, (N3,), 0, C3, dtype=jnp.int32)
    loss3 = jax.jit(lambda a, b: f1_loss(a, b, max_tile=16))(yp3, yt3)
    jax.block_until_ready(loss3)
    ref3 = _f1_loss_ref(yp3, yt3)
    assert jnp.allclose(loss3, ref3, atol=1e-4, rtol=1e-4), (loss3, ref3)

    print("KERNEL_OK")
</pallas_src>

<mosaic_0001>
module attributes {stable_mosaic.version = 11 : i64} {
  func.func @_f1_partials_kernel_cn(%arg0: i32, %arg1: i32, %arg2: memref<8x128xf32, #tpu.memory_space<vmem>>, %arg3: memref<1x128xi32, #tpu.memory_space<vmem>>, %arg4: memref<8x128xf32, #tpu.memory_space<vmem>>, %arg5: memref<8x128xf32, #tpu.memory_space<vmem>>, %arg6: memref<8x128xf32, #tpu.memory_space<vmem>>, %arg7: memref<8x1xf32, #tpu.memory_space<vmem>>, %arg8: memref<8x1xf32, #tpu.memory_space<vmem>>, %arg9: memref<8x1xf32, #tpu.memory_space<vmem>>) attributes {dimension_semantics = [#tpu.dimension_semantics<parallel>, #tpu.dimension_semantics<arbitrary>], iteration_bounds = array<i64: 1, 1>, scalar_prefetch = 0 : i64, scratch_operands = 3 : i64, tpu.core_type = #tpu.core_type<tc>, window_params = [{transform_indices = @transform_0, window_bounds = array<i64: 8, 128>}, {transform_indices = @transform_1, window_bounds = array<i64: 1, 128>}, {transform_indices = @transform_2, window_bounds = array<i64: 8, 128>}, {transform_indices = @transform_3, window_bounds = array<i64: 8, 128>}, {transform_indices = @transform_4, window_bounds = array<i64: 8, 128>}]} {
    %c0_i32 = arith.constant 0 : i32
    %0 = arith.cmpi eq, %arg1, %c0_i32 : i32
    %1 = arith.extui %0 : i1 to i32
    %c0_i32_0 = arith.constant 0 : i32
    %2 = arith.cmpi ne, %1, %c0_i32_0 : i32
    scf.if %2 {
      %cst_27 = arith.constant 0.000000e+00 : f32
      %52 = vector.broadcast %cst_27 : f32 to vector<8x1xf32>
      %c0_28 = arith.constant 0 : index
      %c0_29 = arith.constant 0 : index
      %53 = vector.load %arg7[%c0_28, %c0_29] : memref<8x1xf32, #tpu.memory_space<vmem>>, vector<8x1xf32>
      tpu.vector_store %arg7[%c0_28, %c0_29], %52 {strides = array<i32>} : memref<8x1xf32, #tpu.memory_space<vmem>>, vector<8x1xf32>,
      %cst_30 = arith.constant 0.000000e+00 : f32
      %54 = vector.broadcast %cst_30 : f32 to vector<8x1xf32>
      %c0_31 = arith.constant 0 : index
      %c0_32 = arith.constant 0 : index
      %55 = vector.load %arg8[%c0_31, %c0_32] : memref<8x1xf32, #tpu.memory_space<vmem>>, vector<8x1xf32>
      tpu.vector_store %arg8[%c0_31, %c0_32], %54 {strides = array<i32>} : memref<8x1xf32, #tpu.memory_space<vmem>>, vector<8x1xf32>,
      %cst_33 = arith.constant 0.000000e+00 : f32
      %56 = vector.broadcast %cst_33 : f32 to vector<8x1xf32>
      %c0_34 = arith.constant 0 : index
      %c0_35 = arith.constant 0 : index
      %57 = vector.load %arg9[%c0_34, %c0_35] : memref<8x1xf32, #tpu.memory_space<vmem>>, vector<8x1xf32>
      tpu.vector_store %arg9[%c0_34, %c0_35], %56 {strides = array<i32>} : memref<8x1xf32, #tpu.memory_space<vmem>>, vector<8x1xf32>,
    } else {
    }
    %c0 = arith.constant 0 : index
    %c0_1 = arith.constant 0 : index
    %3 = vector.load %arg3[%c0, %c0_1] : memref<1x128xi32, #tpu.memory_space<vmem>>, vector<1x128xi32>
    %c0_i32_2 = arith.constant 0 : i32
    %4 = vector.broadcast %c0_i32_2 : i32 to vector<1x128xi32>
    %5 = arith.cmpi sge, %3, %4 : vector<1x128xi32>
    %c0_3 = arith.constant 0 : index
    %c0_4 = arith.constant 0 : index
    %6 = vector.load %arg2[%c0_3, %c0_4] : memref<8x128xf32, #tpu.memory_space<vmem>>, vector<8x128xf32>
    %cst = arith.constant 0.000000e+00 : f32
    %7 = vector.shape_cast %5 : vector<1x128xi1> to vector<1x128xi1>
    %8 = vector.broadcast %7 : vector<1x128xi1> to vector<8x128xi1>
    %9 = vector.broadcast %cst : f32 to vector<8x128xf32>
    %10 = arith.select %8, %6, %9 : vector<8x128xi1>, vector<8x128xf32>
    %cst_5 = arith.constant dense<0xFF800000> : vector<128xf32>
    %11 = vector.multi_reduction <maximumf>, %10, %cst_5 [0] : vector<8x128xf32> to vector<128xf32>
    %12 = vector.shape_cast %11 : vector<128xf32> to vector<1x128xf32>
    %13 = vector.broadcast %12 : vector<1x128xf32> to vector<8x128xf32>
    %14 = arith.subf %10, %13 : vector<8x128xf32>
    %15 = math.exp %14 : vector<8x128xf32>
    %cst_6 = arith.constant dense<0.000000e+00> : vector<128xf32>
    %16 = vector.multi_reduction <add>, %15, %cst_6 [0] : vector<8x128xf32> to vector<128xf32>
    %17 = vector.shape_cast %16 : vector<128xf32> to vector<1x128xf32>
    %18 = tpu.reciprocal %17 {approx = true} : vector<1x128xf32> -> vector<1x128xf32>
    %19 = arith.mulf %17, %18 : vector<1x128xf32>
    %cst_7 = arith.constant 2.000000e+00 : f32
    %20 = vector.broadcast %cst_7 : f32 to vector<1x128xf32>
    %21 = arith.subf %20, %19 : vector<1x128xf32>
    %22 = arith.mulf %18, %21 : vector<1x128xf32>
    %cst_8 = arith.constant 0.000000e+00 : f32
    %23 = vector.broadcast %cst_8 : f32 to vector<1x128xf32>
    %24 = arith.select %5, %22, %23 : vector<1x128xi1>, vector<1x128xf32>
    %25 = vector.broadcast %24 : vector<1x128xf32> to vector<8x128xf32>
    %26 = arith.mulf %15, %25 : vector<8x128xf32>
    %27 = tpu.iota {dimensions = array<i32: 0>} : vector<8x128xi32>
    %28 = vector.broadcast %3 : vector<1x128xi32> to vector<8x128xi32>
    %29 = arith.cmpi eq, %28, %27 : vector<8x128xi32>
    %c0_9 = arith.constant 0 : index
    %c0_10 = arith.constant 0 : index
    %30 = vector.load %arg7[%c0_9, %c0_10] : memref<8x1xf32, #tpu.memory_space<vmem>>, vector<8x1xf32>
    %cst_11 = arith.constant 0.000000e+00 : f32
    %31 = vector.broadcast %cst_11 : f32 to vector<8x128xf32>
    %32 = arith.select %29, %26, %31 : vector<8x128xi1>, vector<8x128xf32>
    %cst_12 = arith.constant dense<0.000000e+00> : vector<8xf32>
    %33 = vector.multi_reduction <add>, %32, %cst_12 [1] : vector<8x128xf32> to vector<8xf32>
    %34 = vector.shape_cast %33 : vector<8xf32> to vector<8x1xf32>
    %35 = arith.addf %30, %34 : vector<8x1xf32>
    %c0_13 = arith.constant 0 : index
    %c0_14 = arith.constant 0 : index
    %36 = vector.load %arg7[%c0_13, %c0_14] : memref<8x1xf32, #tpu.memory_space<vmem>>, vector<8x1xf32>
    tpu.vector_store %arg7[%c0_13, %c0_14], %35 {strides = array<i32>} : memref<8x1xf32, #tpu.memory_space<vmem>>, vector<8x1xf32>,
    %c0_15 = arith.constant 0 : index
    %c0_16 = arith.constant 0 : index
    %37 = vector.load %arg8[%c0_15, %c0_16] : memref<8x1xf32, #tpu.memory_space<vmem>>, vector<8x1xf32>
    %cst_17 = arith.constant dense<0.000000e+00> : vector<8xf32>
    %38 = vector.multi_reduction <add>, %26, %cst_17 [1] : vector<8x128xf32> to vector<8xf32>
    %39 = vector.shape_cast %38 : vector<8xf32> to vector<8x1xf32>
    %40 = arith.addf %37, %39 : vector<8x1xf32>
    %c0_18 = arith.constant 0 : index
    %c0_19 = arith.constant 0 : index
    %41 = vector.load %arg8[%c0_18, %c0_19] : memref<8x1xf32, #tpu.memory_space<vmem>>, vector<8x1xf32>
    tpu.vector_store %arg8[%c0_18, %c0_19], %40 {strides = array<i32>} : memref<8x1xf32, #tpu.memory_space<vmem>>, vector<8x1xf32>,
    %c0_20 = arith.constant 0 : index
    %c0_21 = arith.constant 0 : index
    %42 = vector.load %arg9[%c0_20, %c0_21] : memref<8x1xf32, #tpu.memory_space<vmem>>, vector<8x1xf32>
    %43 = arith.extui %29 : vector<8x128xi1> to vector<8x128xi32>
    %44 = arith.sitofp %43 : vector<8x128xi32> to vector<8x128xf32>
    %cst_22 = arith.constant dense<0.000000e+00> : vector<8xf32>
    %45 = vector.multi_reduction <add>, %44, %cst_22 [1] : vector<8x128xf32> to vector<8xf32>
    %46 = vector.shape_cast %45 : vector<8xf32> to vector<8x1xf32>
    %47 = arith.addf %42, %46 : vector<8x1xf32>
    %c0_23 = arith.constant 0 : index
    %c0_24 = arith.constant 0 : index
    %48 = vector.load %arg9[%c0_23, %c0_24] : memref<8x1xf32, #tpu.memory_space<vmem>>, vector<8x1xf32>
    tpu.vector_store %arg9[%c0_23, %c0_24], %47 {strides = array<i32>} : memref<8x1xf32, #tpu.memory_space<vmem>>, vector<8x1xf32>,
    %c0_i32_25 = arith.constant 0 : i32
    %49 = arith.cmpi eq, %arg1, %c0_i32_25 : i32
    %50 = arith.extui %49 : i1 to i32
    %c0_i32_26 = arith.constant 0 : i32
    %51 = arith.cmpi ne, %50, %c0_i32_26 : i32
    scf.if %51 {
      %c0_27 = arith.constant 0 : index
      %c0_28 = arith.constant 0 : index
      %52 = vector.load %arg7[%c0_27, %c0_28] : memref<8x1xf32, #tpu.memory_space<vmem>>, vector<8x1xf32>
      %53 = vector.shape_cast %52 : vector<8x1xf32> to vector<8x1xf32>
      %54 = vector.broadcast %53 : vector<8x1xf32> to vector<8x128xf32>
      %c0_29 = arith.constant 0 : index
      %c0_30 = arith.constant 0 : index
      %55 = vector.load %arg4[%c0_29, %c0_30] : memref<8x128xf32, #tpu.memory_space<vmem>>, vector<8x128xf32>
      tpu.vector_store %arg4[%c0_29, %c0_30], %54 {strides = array<i32>} : memref<8x128xf32, #tpu.memory_space<vmem>>, vector<8x128xf32>,
      %c0_31 = arith.constant 0 : index
      %c0_32 = arith.constant 0 : index
      %56 = vector.load %arg8[%c0_31, %c0_32] : memref<8x1xf32, #tpu.memory_space<vmem>>, vector<8x1xf32>
      %57 = vector.shape_cast %56 : vector<8x1xf32> to vector<8x1xf32>
      %58 = vector.broadcast %57 : vector<8x1xf32> to vector<8x128xf32>
      %c0_33 = arith.constant 0 : index
      %c0_34 = arith.constant 0 : index
      %59 = vector.load %arg5[%c0_33, %c0_34] : memref<8x128xf32, #tpu.memory_space<vmem>>, vector<8x128xf32>
      tpu.vector_store %arg5[%c0_33, %c0_34], %58 {strides = array<i32>} : memref<8x128xf32, #tpu.memory_space<vmem>>, vector<8x128xf32>,
      %c0_35 = arith.constant 0 : index
      %c0_36 = arith.constant 0 : index
      %60 = vector.load %arg9[%c0_35, %c0_36] : memref<8x1xf32, #tpu.memory_space<vmem>>, vector<8x1xf32>
      %61 = vector.shape_cast %60 : vector<8x1xf32> to vector<8x1xf32>
      %62 = vector.broadcast %61 : vector<8x1xf32> to vector<8x128xf32>
      %c0_37 = arith.constant 0 : index
      %c0_38 = arith.constant 0 : index
      %63 = vector.load %arg6[%c0_37, %c0_38] : memref<8x128xf32, #tpu.memory_space<vmem>>, vector<8x128xf32>
      tpu.vector_store %arg6[%c0_37, %c0_38], %62 {strides = array<i32>} : memref<8x128xf32, #tpu.memory_space<vmem>>, vector<8x128xf32>,
    } else {
    }
    return
  }
  func.func @transform_0(%arg0: i32, %arg1: i32) -> (i32, i32) {
    %c1_i32 = arith.constant 1 : i32
    %0 = arith.muli %arg0, %c1_i32 : i32
    %1 = arith.addi %0, %arg1 : i32
    %c0_i32 = arith.constant 0 : i32
    %2 = arith.minsi %1, %c0_i32 : i32
    %c0_i32_0 = arith.constant 0 : i32
    %c0_i32_1 = arith.constant 0 : i32
    return %c0_i32_0, %2 : i32, i32
  }
  func.func @transform_1(%arg0: i32, %arg1: i32) -> (i32, i32) {
    %c1_i32 = arith.constant 1 : i32
    %0 = arith.muli %arg0, %c1_i32 : i32
    %1 = arith.addi %0, %arg1 : i32
    %c0_i32 = arith.constant 0 : i32
    %c0_i32_0 = arith.constant 0 : i32
    return %c0_i32, %1 : i32, i32
  }
  func.func @transform_2(%arg0: i32, %arg1: i32) -> (i32, i32) {
    %c0_i32 = arith.constant 0 : i32
    %c0_i32_0 = arith.constant 0 : i32
    return %c0_i32, %arg0 : i32, i32
  }
  func.func @transform_3(%arg0: i32, %arg1: i32) -> (i32, i32) {
    %c0_i32 = arith.constant 0 : i32
    %c0_i32_0 = arith.constant 0 : i32
    return %c0_i32, %arg0 : i32, i32
  }
  func.func @transform_4(%arg0: i32, %arg1: i32) -> (i32, i32) {
    %c0_i32 = arith.constant 0 : i32
    %c0_i32_0 = arith.constant 0 : i32
    return %c0_i32, %arg0 : i32, i32
  }
}

</mosaic_0001>

<llo_original>
// kernel: f1_loss.1
$region0: #{f1_loss.1}
  #allocation0 [shape = 'u32[]', space=smem, size = 0x4, offset = 0x4, fixed_abs, tag = 'smem constant byte address 0x4 - core index']
  #allocation1 [shape = 'u32[144,128]{1,0:T(1,128)}', space=vmem, size = 0x12000, scoped, tag = 'internal scratch']
  #allocation2 [shape = 'f32[8,1]{1,0:T(8,128)}', space=vmem, size = 0x1000, scoped, tag = 'scratch operand']
  #allocation3 [shape = 'f32[8,1]{1,0:T(8,128)}', space=vmem, size = 0x1000, scoped, tag = 'scratch operand']
  #allocation4 [shape = 'f32[8,1]{1,0:T(8,128)}', space=vmem, size = 0x1000, scoped, tag = 'scratch operand']
  %s0 = inlined_call_operand.hbm [shape: f32[8,16], index: 0, kind: input, shape index: {}]
  %s1 = inlined_call_operand.vmem [shape: s32[1,128], index: 1, kind: input, shape index: {}]
  %s2 = inlined_call_operand.vmem [shape: f32[8,128], index: 2, kind: output, shape index: {0}]
  %s3 = inlined_call_operand.vmem [shape: f32[8,128], index: 3, kind: output, shape index: {1}]
  %s4 = inlined_call_operand.vmem [shape: f32[8,128], index: 4, kind: output, shape index: {2}]
  %5 = xla_tuple %s2, %s3, %s4
  %s6 = sld [smem:[#allocation0]]
  $region46: #{f1_loss.1} parent=0
    _
  %s8 = ssub.s32 1, %s6
  %s9 = scalar_select 0, %s8, %s6
  $region1: #{f1_loss.1} parent=0
    #allocation5 [shape = 'u8[4096]{0}', space=vmem, size = 0x1000, scoped, tag = 'input window, operand 0, single buffered']
    #allocation6 [shape = 's32[1]{0}', space=sflag, size = 0x4, scoped, tag = 'scoped memory for f1_loss.1']
    %10 = vsyncpa [#allocation6], 0
    // Predicated region
    $region2: #{f1_loss.1} parent=1 // pred_check
      _
    $region3: #{f1_loss.1} parent=1 // pred_check_branch
      %12 = sbr.rel (0) target = $region5
    $region4: #{f1_loss.1} parent=1 // pred_region
      %s13 = sadd.s32 0, 0
      %p14 = scmp.lt.s32.totalorder %s13, 0
      %s15 = scalar_select %p14, %s13, 0
      %s17 = ssub.s32 128, 128
      %18 = vsyncadd [#allocation6], %s17
      %s19 = smul.addr %s15, 128
      %s20 = scalar_lea.hbm %s0, %s19
      %s22 = sshll.u32 [#allocation5], 4
      %s23 = int_to_ptr.vmem [resolvable:$true] %s22
      %25 = dma.hbm_to_vmem [thread:$0]  %s20, 128, %s23, [#allocation6]
    $region5: #{f1_loss.1} parent=1 // pred_fallthru
      _
    // Predicated region
    $region6: #{f1_loss.1} parent=1 // pred_check
      _
    $region7: #{f1_loss.1} parent=1 // pred_check_branch
      %27 = sbr.rel (0) target = $region9
    $region8: #{f1_loss.1} parent=1 // pred_region
      %s28 = sadd.s32 0, 0
      %p29 = scmp.lt.s32.totalorder %s28, 0
      %s30 = scalar_select %p29, %s28, 0
      %s31 = scalar_lea.vmem %s1, %s30
      %s32 = sadd.s32 0, 0
    $region9: #{f1_loss.1} parent=1 // pred_fallthru
      _
    // Predicated region
    $region10: #{f1_loss.1} parent=1 // pred_check
      _
    $region11: #{f1_loss.1} parent=1 // pred_check_branch
      %34 = sbr.rel (0) target = $region13
    $region12: #{f1_loss.1} parent=1 // pred_region
      %35 = dma.done [#allocation6], 128
    $region13: #{f1_loss.1} parent=1 // pred_fallthru
      _
    %s36 = sadd.s32 0, 0
    %p37 = scmp.lt.s32.totalorder %s36, 0
    %s38 = scalar_select %p37, %s36, 0
    %s39 = scalar_lea.vmem %s1, %s38
    %s40 = sadd.s32 0, 0
    %p41 = scmp.lt.s32.totalorder %s40, 0
    %s42 = scalar_select %p41, %s40, 0
    %s43 = sadd.s32 0, 0
    %p44 = scmp.lt.s32.totalorder %s43, 0
    %s45 = scalar_select %p44, %s43, 0
    %s46 = scalar_lea.vmem %s1, %s45
    %s47 = sadd.s32 0, 0
    %p48 = scmp.eq.s32.totalorder 0, 0
    // Predicated region
    $region14: #{f1_loss.1} parent=1 // pred_check
      %p49 = pneg %p48
    $region15: #{f1_loss.1} parent=1 // pred_check_branch
      %51 = sbr.rel (%p49) target = $region17
    $region16: #{f1_loss.1} parent=1 // pred_region
      %vm52 = vcmask 7168
      %53 = vst.msk [vmem:[#allocation2] sm:$0xff] %vm52, 0.0
      %54 = vst.msk [vmem:[#allocation3] sm:$0xff] %vm52, 0.0
      %55 = vst.msk [vmem:[#allocation4] sm:$0xff] %vm52, 0.0
    $region17: #{f1_loss.1} parent=1 // pred_fallthru
      _
    %v56 = vld [vmem:[%s46] sm:$0x1]
    %vm57 = vcmp.ge.s32.totalorder %v56, 0
    %v58 = vld [vmem:[#allocation5] sm:$0xff]
    %v59 = vsel %vm57, 1, 0
    %v60 = vlaneseq
    %v61 = vshrl.u32 %v60, 7
    %v62 = vsub.s32 0, %v61
    %v63 = vrot.slane %v59, %v62
    %vm64 = vcmp.eq.s32.totalorder %v63, 1
    %v65 = vsel %vm64, %v58, 0.0
    %v66 = vrot.slane %v65, 4
    %v67 = vmax.f32 %v65, %v66
    %v68 = vrot.slane %v67, 2
    %v69 = vmax.f32 %v67, %v68
    %v70 = vrot.slane %v69, 1
    %v71 = vmax.f32 %v69, %v70
    %v72 = vsub.f32 %v65, %v71
    %v73 = vmul.f32 %v72, 1.442695
    %v74 = vpow.pop %v73
    %v75 = vrot.slane %v74, 4
    %v76 = vadd.f32 %v74, %v75
    %v77 = vrot.slane %v76, 2
    %v78 = vadd.f32 %v76, %v77
    %v79 = vrot.slane %v78, 1
    %v80 = vadd.f32 %v78, %v79
    %v81 = vrcp.pop %v80
    %v82 = vmul.f32 %v80, %v81
    %v83 = vsub.f32 2.0, %v82
    %v84 = vmul.f32 %v81, %v83
    %v85 = vsel %vm57, %v84, 0.0
    %v87 = vlaneseq
    %v88 = vshrl.u32 %v87, 7
    %v89 = vsub.s32 0, %v88
    %v90 = vrot.slane %v85, %v89
    %v92 = vmul.f32 %v74, %v90
    %v93 = vlaneseq
    %v94 = vshrl.u32 %v93, 7
    %v95 = vlaneseq
    %v96 = vshrl.u32 %v95, 7
    %v97 = vsub.s32 0, %v96
    %v98 = vrot.slane %v56, %v97
    %vm99 = vcmp.eq.s32.totalorder %v98, %v94
    %v100 = vld [vmem:[#allocation2] sm:$0xff]
    %v101 = vsel %vm99, %v92, 0.0
    %102 = vadd.xlane.f32.xlu0 %v101
    %v103 = vpop.xlane.xlu0 %102
    %v104 = vadd.f32 %v100, %v103
    %vm105 = vcmask 7168
    %106 = vst.msk [vmem:[#allocation2] sm:$0xff] %vm105, %v104
    %v107 = vld [vmem:[#allocation3] sm:$0xff]
    %108 = vadd.xlane.f32.xlu0 %v92
    %v109 = vpop.xlane.xlu0 %108
    %v110 = vadd.f32 %v107, %v109
    %111 = vst.msk [vmem:[#allocation3] sm:$0xff] %vm105, %v110
    %v112 = vld [vmem:[#allocation4] sm:$0xff]
    %v113 = vsel %vm99, 1, 0
    %v114 = vcvt.s32.f32 %v113
    %115 = vadd.xlane.f32.xlu0 %v114
    %v116 = vpop.xlane.xlu0 %115
    %v117 = vadd.f32 %v112, %v116
    %118 = vst.msk [vmem:[#allocation4] sm:$0xff] %vm105, %v117
    // Predicated region
    $region18: #{f1_loss.1} parent=1 // pred_check
      %p119 = pneg %p48
    $region19: #{f1_loss.1} parent=1 // pred_check_branch
      %121 = sbr.rel (%p119) target = $region21
    $region20: #{f1_loss.1} parent=1 // pred_region
      %v122 = vld [vmem:[#allocation2] sm:$0xff]
      %124 = vset.pattern.permute.xlu0 0
      %125 = vperm.xlu0 %124, %v122
      %v126 = vpop.permute.xlu0 %125
      %128 = vst [vmem:[%s2] sm:$0xff] %v126
      %v129 = vld [vmem:[#allocation3] sm:$0xff]
      %131 = vset.pattern.permute.xlu0 0
      %132 = vperm.xlu0 %131, %v129
      %v133 = vpop.permute.xlu0 %132
      %135 = vst [vmem:[%s3] sm:$0xff] %v133
      %v136 = vld [vmem:[#allocation4] sm:$0xff]
      %138 = vset.pattern.permute.xlu0 0
      %139 = vperm.xlu0 %138, %v136
      %v140 = vpop.permute.xlu0 %139
      %142 = vst [vmem:[%s4] sm:$0xff] %v140
    $region21: #{f1_loss.1} parent=1 // pred_fallthru
      _
    // Predicated region
    $region22: #{f1_loss.1} parent=1 // pred_check
      _
    $region23: #{f1_loss.1} parent=1 // pred_check_branch
      %144 = sbr.rel (0) target = $region25
    $region24: #{f1_loss.1} parent=1 // pred_region
      _
    $region25: #{f1_loss.1} parent=1 // pred_fallthru
      _
    // Predicated region
    $region26: #{f1_loss.1} parent=1 // pred_check
      _
    $region27: #{f1_loss.1} parent=1 // pred_check_branch
      %146 = sbr.rel (0) target = $region29
    $region28: #{f1_loss.1} parent=1 // pred_region
      _
    $region29: #{f1_loss.1} parent=1 // pred_fallthru
      _
    // Predicated region
    $region30: #{f1_loss.1} parent=1 // pred_check
      _
    $region31: #{f1_loss.1} parent=1 // pred_check_branch
      %148 = sbr.rel (0) target = $region33
    $region32: #{f1_loss.1} parent=1 // pred_region
      _
    $region33: #{f1_loss.1} parent=1 // pred_fallthru
      _
    // Predicated region
    $region34: #{f1_loss.1} parent=1 // pred_check
      _
    $region35: #{f1_loss.1} parent=1 // pred_check_branch
      %150 = sbr.rel (0) target = $region37
    $region36: #{f1_loss.1} parent=1 // pred_region
      _
    $region37: #{f1_loss.1} parent=1 // pred_fallthru
      _
    // Predicated region
    $region38: #{f1_loss.1} parent=1 // pred_check
      _
    $region39: #{f1_loss.1} parent=1 // pred_check_branch
      %152 = sbr.rel (0) target = $region41
    $region40: #{f1_loss.1} parent=1 // pred_region
      _
    $region41: #{f1_loss.1} parent=1 // pred_fallthru
      _
    // Predicated region
    $region42: #{f1_loss.1} parent=1 // pred_check
      _
    $region43: #{f1_loss.1} parent=1 // pred_check_branch
      %154 = sbr.rel (0) target = $region45
    $region44: #{f1_loss.1} parent=1 // pred_region
      _
    $region45: #{f1_loss.1} parent=1 // pred_fallthru
      _
    %155 = vsyncpa [#allocation6], 1

</llo_original>
